<compile_context>
chip_gen: v6e
topology: v6e:2x2x1
jax: 0.10.0
libtpu: 0.0.40
codegen_flags: <defaults>
</compile_context>

<pallas_src>
import functools

import jax
import jax.numpy as jnp
from jax.experimental import pallas as pl
from jax.experimental.pallas import tpu as pltpu


def _round_up(n, m):
    return ((n + m - 1) // m) * m


def _cdiv(a, b):
    return -(-a // b)


def _choose_batch_tile(B, block_batch):
    """Pick (TB, BP): tile rows (mult. of 8) and padded batch, bounding pad waste and
    keeping >=2 grid steps when possible so v7x megacore sharding has work on both TCs."""
    Bp = _round_up(B, 8)
    n_tiles = max(_cdiv(Bp, block_batch), 1)
    if n_tiles == 1 and Bp >= 16:
        n_tiles = 2                      # v7x: give both TensorCores a tile
    TB = _round_up(_cdiv(Bp, n_tiles), 8)
    BP = TB * _cdiv(Bp, TB)
    return TB, BP


def _replicator_mlp_kernel(x_ref, w1_ref, b1_ref, w2_ref, b2_ref,
                           w3_ref, b3_ref, skip_ref, out_ref):
    # x_ref: (TB, D) in caller dtype; weights in the MXU dtype (bf16 or f32);
    # biases / skip in f32.  Matmuls accumulate in f32; all elementwise math and the
    # replicator reduction stay in f32.
    x = x_ref[...]                                   # single vld of the tile
    x_f32 = x.astype(jnp.float32)
    x_mm = x.astype(w1_ref.dtype)                    # MXU operand

    h1 = jnp.tanh(
        jnp.dot(x_mm, w1_ref[...], preferred_element_type=jnp.float32)      # (TB, H)
        + b1_ref[...])
    h2 = jnp.tanh(
        jnp.dot(h1.astype(w2_ref.dtype), w2_ref[...],
                preferred_element_type=jnp.float32)                          # (TB, H)
        + b2_ref[...])
    fit = (jnp.dot(h2.astype(w3_ref.dtype), w3_ref[...],
                   preferred_element_type=jnp.float32)                       # (TB, D)
           + b3_ref[...])

    # learnable scalar skip connection on the fitness function.
    fit = fit + skip_ref[...] * x_f32

    # replicator dynamics: dx = x * (f(x) - <x, f(x)>)   (row reduction -> XLU)
    x_dot_f = jnp.sum(x_f32 * fit, axis=-1, keepdims=True)                   # (TB, 1)
    out_ref[...] = (x_f32 * (fit - x_dot_f)).astype(out_ref.dtype)


def prepare_params(params, matmul_dtype=jnp.bfloat16):
    """One-time parameter preparation (cast MXU operands, keep biases/skip in f32).

    Call once per parameter set; the returned tuple is what replicator_shallow_mlp2
    consumes, so no per-call pad/cast XLA ops are launched around the kernel.
    """
    w1, b1, w2, b2, w3, b3, skip = params
    f32 = jnp.float32
    return (w1.astype(matmul_dtype), b1.astype(f32),
            w2.astype(matmul_dtype), b2.astype(f32),
            w3.astype(matmul_dtype), b3.astype(f32),
            skip.astype(f32).reshape(1, 1))


def replicator_shallow_mlp2(t, x, prepared_params, *, block_batch=2048):
    """Pallas-backed forward pass.  t is accepted for ODE-solver API parity.

    `prepared_params` must come from prepare_params().  Batch many ODE states into a
    single call (large leading dim of x) to amortize the launch: weights are DMA'd once
    and stay VMEM-resident while (TB, D) batch tiles are pipelined through the grid.
    """
    del t  # autonomous vector field: fitness does not depend on t
    w1, b1, w2, b2, w3, b3, skip = prepared_params
    B, D = x.shape
    H = w1.shape[1]

    TB, BP = _choose_batch_tile(B, block_batch)
    x_in = x if BP == B else jnp.pad(x, ((0, BP - B), (0, 0)))

    const = lambda i: (0, 0)          # resident block: same index every grid step
    tile = lambda i: (i, 0)           # batch-tiled x / out

    itemsize = jnp.dtype(x.dtype).itemsize
    param_bytes = sum(int(p.size) * jnp.dtype(p.dtype).itemsize
                      for p in (w1, b1, w2, b2, w3, b3, skip))
    cost = pl.CostEstimate(
        flops=2 * BP * (D * H + H * H + H * D) + 8 * BP * D,
        transcendentals=2 * BP * H,
        bytes_accessed=2 * BP * D * itemsize + param_bytes)

    out_padded = pl.pallas_call(
        _replicator_mlp_kernel,
        out_shape=jax.ShapeDtypeStruct((BP, D), x.dtype),
        grid=(BP // TB,),
        in_specs=[
            pl.BlockSpec((TB, D), tile),    # x tile (double-buffered)
            pl.BlockSpec((D, H), const),    # W1 (resident)
            pl.BlockSpec((1, H), const),    # b1
            pl.BlockSpec((H, H), const),    # W2
            pl.BlockSpec((1, H), const),    # b2
            pl.BlockSpec((H, D), const),    # W3
            pl.BlockSpec((1, D), const),    # b3
            pl.BlockSpec((1, 1), const),    # skip scalar
        ],
        out_specs=pl.BlockSpec((TB, D), tile),
        compiler_params=pltpu.CompilerParams(
            dimension_semantics=("parallel",)),   # shard batch tiles across v7x TCs
        cost_estimate=cost,
    )(x_in, w1, b1, w2, b2, w3, b3, skip)

    return out_padded if BP == B else out_padded[:B]


def init_params(key, data_dim, hidden_dim, learnable_skip=True, dtype=jnp.float32):
    """Deterministic PyTorch-style uniform(-1/sqrt(fan_in), 1/sqrt(fan_in)) init."""
    ks = jax.random.split(key, 6)

    def lin(kw, kb, fan_in, fan_out):
        bound = 1.0 / jnp.sqrt(float(fan_in))
        w = jax.random.uniform(kw, (fan_in, fan_out), dtype, -bound, bound)
        b = jax.random.uniform(kb, (1, fan_out), dtype, -bound, bound)
        return w, b

    w1, b1 = lin(ks[0], ks[1], data_dim, hidden_dim)
    w2, b2 = lin(ks[2], ks[3], hidden_dim, hidden_dim)
    w3, b3 = lin(ks[4], ks[5], hidden_dim, data_dim)
    # learnable scalar skip weight (init 1.0); if not learnable_skip, fixed 0.0
    skip = jnp.full((1, 1), 1.0 if learnable_skip else 0.0, dtype=dtype)
    return (w1, b1, w2, b2, w3, b3, skip)


def _reference(t, x, params):
    """Pure-JAX f32 reference for correctness checking."""
    del t
    w1, b1, w2, b2, w3, b3, skip = params
    xf = x.astype(jnp.float32)
    h1 = jnp.tanh(xf @ w1 + b1)
    h2 = jnp.tanh(h1 @ w2 + b2)
    fit = h2 @ w3 + b3 + skip[0, 0] * xf
    x_dot_f = jnp.sum(xf * fit, axis=-1, keepdims=True)
    return (xf * (fit - x_dot_f)).astype(x.dtype)


if __name__ == "__main__":
    data_dim, hidden_dim = 16, 32

    key = jax.random.PRNGKey(0)
    k_params, k_x1, k_x2 = jax.random.split(key, 3)
    params = init_params(k_params, data_dim, hidden_dim, learnable_skip=True)
    t = jnp.float32(0.0)

    # One-time parameter preparation (hoisted out of the per-call path).
    params_f32 = prepare_params(params, matmul_dtype=jnp.float32)    # exact-parity path
    params_bf16 = prepare_params(params, matmul_dtype=jnp.bfloat16)  # fast MXU path

    fwd = jax.jit(functools.partial(replicator_shallow_mlp2))

    # Replicator dynamics evolve on the simplex; use softmax'd states.
    # (1) small batch -> single grid tile; (2) moderate batch (non-multiple of 8*tile)
    # -> exercises multi-tile grid, batch padding, and resident weights.
    x_small = jax.nn.softmax(
        jax.random.normal(k_x1, (8, data_dim), jnp.float32), axis=-1)
    x_big = jax.nn.softmax(
        jax.random.normal(k_x2, (1000, data_dim), jnp.float32), axis=-1)

    for x in (x_small, x_big):
        ref = _reference(t, x, params)

        out_f32 = jax.block_until_ready(fwd(t, x, params_f32))
        assert out_f32.shape == x.shape
        assert jnp.allclose(out_f32, ref, atol=1e-5, rtol=1e-5)

        out_bf16 = jax.block_until_ready(fwd(t, x, params_bf16))
        assert out_bf16.shape == x.shape
        assert jnp.allclose(out_bf16, ref, atol=5e-3, rtol=5e-2)

    print("KERNEL_OK")
</pallas_src>

<mosaic_0001>
module attributes {stable_mosaic.version = 11 : i64} {
  func.func @_replicator_mlp_kernel(%arg0: i32, %arg1: memref<8x16xf32, #tpu.memory_space<vmem>>, %arg2: memref<16x32xf32, #tpu.memory_space<vmem>>, %arg3: memref<1x32xf32, #tpu.memory_space<vmem>>, %arg4: memref<32x32xf32, #tpu.memory_space<vmem>>, %arg5: memref<1x32xf32, #tpu.memory_space<vmem>>, %arg6: memref<32x16xf32, #tpu.memory_space<vmem>>, %arg7: memref<1x16xf32, #tpu.memory_space<vmem>>, %arg8: memref<1x1xf32, #tpu.memory_space<vmem>>, %arg9: memref<8x16xf32, #tpu.memory_space<vmem>>) attributes {dimension_semantics = [#tpu.dimension_semantics<parallel>], iteration_bounds = array<i64: 1>, scalar_prefetch = 0 : i64, scratch_operands = 0 : i64, tpu.core_type = #tpu.core_type<tc>, window_params = [{transform_indices = @transform_0, window_bounds = array<i64: 8, 16>}, {pipeline_mode = #tpu.pipeline_mode<synchronous>, transform_indices = @transform_1, window_bounds = array<i64: 16, 32>}, {pipeline_mode = #tpu.pipeline_mode<synchronous>, transform_indices = @transform_2, window_bounds = array<i64: 1, 32>}, {pipeline_mode = #tpu.pipeline_mode<synchronous>, transform_indices = @transform_3, window_bounds = array<i64: 32, 32>}, {pipeline_mode = #tpu.pipeline_mode<synchronous>, transform_indices = @transform_4, window_bounds = array<i64: 1, 32>}, {pipeline_mode = #tpu.pipeline_mode<synchronous>, transform_indices = @transform_5, window_bounds = array<i64: 32, 16>}, {pipeline_mode = #tpu.pipeline_mode<synchronous>, transform_indices = @transform_6, window_bounds = array<i64: 1, 16>}, {pipeline_mode = #tpu.pipeline_mode<synchronous>, transform_indices = @transform_7, window_bounds = array<i64: 1, 1>}, {transform_indices = @transform_8, window_bounds = array<i64: 8, 16>}]} {
    %c0 = arith.constant 0 : index
    %c0_0 = arith.constant 0 : index
    %0 = vector.load %arg1[%c0, %c0_0] : memref<8x16xf32, #tpu.memory_space<vmem>>, vector<8x16xf32>
    %c0_1 = arith.constant 0 : index
    %c0_2 = arith.constant 0 : index
    %1 = vector.load %arg2[%c0_1, %c0_2] : memref<16x32xf32, #tpu.memory_space<vmem>>, vector<16x32xf32>
    %cst = arith.constant dense<0.000000e+00> : vector<8x32xf32>
    %2 = tpu.matmul %0, %1, %cst {dimension_numbers = #tpu.dot_dimension_numbers<[1], [0], [0], [1], [0, 0, 1, 1], [], []>} : vector<8x16xf32>, vector<16x32xf32>, vector<8x32xf32> -> vector<8x32xf32>
    %c0_3 = arith.constant 0 : index
    %c0_4 = arith.constant 0 : index
    %3 = vector.load %arg3[%c0_3, %c0_4] : memref<1x32xf32, #tpu.memory_space<vmem>>, vector<1x32xf32>
    %4 = vector.broadcast %3 : vector<1x32xf32> to vector<8x32xf32>
    %5 = arith.addf %2, %4 : vector<8x32xf32>
    %6 = math.tanh %5 : vector<8x32xf32>
    %c0_5 = arith.constant 0 : index
    %c0_6 = arith.constant 0 : index
    %7 = vector.load %arg4[%c0_5, %c0_6] : memref<32x32xf32, #tpu.memory_space<vmem>>, vector<32x32xf32>
    %cst_7 = arith.constant dense<0.000000e+00> : vector<8x32xf32>
    %8 = tpu.matmul %6, %7, %cst_7 {dimension_numbers = #tpu.dot_dimension_numbers<[1], [0], [0], [1], [0, 0, 1, 1], [], []>} : vector<8x32xf32>, vector<32x32xf32>, vector<8x32xf32> -> vector<8x32xf32>
    %c0_8 = arith.constant 0 : index
    %c0_9 = arith.constant 0 : index
    %9 = vector.load %arg5[%c0_8, %c0_9] : memref<1x32xf32, #tpu.memory_space<vmem>>, vector<1x32xf32>
    %10 = vector.broadcast %9 : vector<1x32xf32> to vector<8x32xf32>
    %11 = arith.addf %8, %10 : vector<8x32xf32>
    %12 = math.tanh %11 : vector<8x32xf32>
    %c0_10 = arith.constant 0 : index
    %c0_11 = arith.constant 0 : index
    %13 = vector.load %arg6[%c0_10, %c0_11] : memref<32x16xf32, #tpu.memory_space<vmem>>, vector<32x16xf32>
    %cst_12 = arith.constant dense<0.000000e+00> : vector<8x16xf32>
    %14 = tpu.matmul %12, %13, %cst_12 {dimension_numbers = #tpu.dot_dimension_numbers<[1], [0], [0], [1], [0, 0, 1, 1], [], []>} : vector<8x32xf32>, vector<32x16xf32>, vector<8x16xf32> -> vector<8x16xf32>
    %c0_13 = arith.constant 0 : index
    %c0_14 = arith.constant 0 : index
    %15 = vector.load %arg7[%c0_13, %c0_14] : memref<1x16xf32, #tpu.memory_space<vmem>>, vector<1x16xf32>
    %16 = vector.broadcast %15 : vector<1x16xf32> to vector<8x16xf32>
    %17 = arith.addf %14, %16 : vector<8x16xf32>
    %c0_15 = arith.constant 0 : index
    %c0_16 = arith.constant 0 : index
    %18 = vector.load %arg8[%c0_15, %c0_16] : memref<1x1xf32, #tpu.memory_space<vmem>>, vector<1x1xf32>
    %19 = vector.broadcast %18 : vector<1x1xf32> to vector<8x16xf32>
    %20 = arith.mulf %19, %0 : vector<8x16xf32>
    %21 = arith.addf %17, %20 : vector<8x16xf32>
    %22 = arith.mulf %0, %21 : vector<8x16xf32>
    %cst_17 = arith.constant dense<0.000000e+00> : vector<8xf32>
    %23 = vector.multi_reduction <add>, %22, %cst_17 [1] : vector<8x16xf32> to vector<8xf32>
    %24 = vector.shape_cast %23 : vector<8xf32> to vector<8x1xf32>
    %25 = vector.broadcast %24 : vector<8x1xf32> to vector<8x16xf32>
    %26 = arith.subf %21, %25 : vector<8x16xf32>
    %27 = arith.mulf %0, %26 : vector<8x16xf32>
    %c0_18 = arith.constant 0 : index
    %c0_19 = arith.constant 0 : index
    %28 = vector.load %arg9[%c0_18, %c0_19] : memref<8x16xf32, #tpu.memory_space<vmem>>, vector<8x16xf32>
    tpu.vector_store %arg9[%c0_18, %c0_19], %27 {strides = array<i32>} : memref<8x16xf32, #tpu.memory_space<vmem>>, vector<8x16xf32>,
    return
  }
  func.func @transform_0(%arg0: i32) -> (i32, i32) {
    %c0_i32 = arith.constant 0 : i32
    %c0_i32_0 = arith.constant 0 : i32
    return %arg0, %c0_i32 : i32, i32
  }
  func.func @transform_1(%arg0: i32) -> (i32, i32) {
    %c0_i32 = arith.constant 0 : i32
    %c0_i32_0 = arith.constant 0 : i32
    %c0_i32_1 = arith.constant 0 : i32
    return %c0_i32, %c0_i32_0 : i32, i32
  }
  func.func @transform_2(%arg0: i32) -> (i32, i32) {
    %c0_i32 = arith.constant 0 : i32
    %c0_i32_0 = arith.constant 0 : i32
    %c0_i32_1 = arith.constant 0 : i32
    return %c0_i32, %c0_i32_0 : i32, i32
  }
  func.func @transform_3(%arg0: i32) -> (i32, i32) {
    %c0_i32 = arith.constant 0 : i32
    %c0_i32_0 = arith.constant 0 : i32
    %c0_i32_1 = arith.constant 0 : i32
    return %c0_i32, %c0_i32_0 : i32, i32
  }
  func.func @transform_4(%arg0: i32) -> (i32, i32) {
    %c0_i32 = arith.constant 0 : i32
    %c0_i32_0 = arith.constant 0 : i32
    %c0_i32_1 = arith.constant 0 : i32
    return %c0_i32, %c0_i32_0 : i32, i32
  }
  func.func @transform_5(%arg0: i32) -> (i32, i32) {
    %c0_i32 = arith.constant 0 : i32
    %c0_i32_0 = arith.constant 0 : i32
    %c0_i32_1 = arith.constant 0 : i32
    return %c0_i32, %c0_i32_0 : i32, i32
  }
  func.func @transform_6(%arg0: i32) -> (i32, i32) {
    %c0_i32 = arith.constant 0 : i32
    %c0_i32_0 = arith.constant 0 : i32
    %c0_i32_1 = arith.constant 0 : i32
    return %c0_i32, %c0_i32_0 : i32, i32
  }
  func.func @transform_7(%arg0: i32) -> (i32, i32) {
    %c0_i32 = arith.constant 0 : i32
    %c0_i32_0 = arith.constant 0 : i32
    %c0_i32_1 = arith.constant 0 : i32
    return %c0_i32, %c0_i32_0 : i32, i32
  }
  func.func @transform_8(%arg0: i32) -> (i32, i32) {
    %c0_i32 = arith.constant 0 : i32
    %c0_i32_0 = arith.constant 0 : i32
    return %arg0, %c0_i32 : i32, i32
  }
}

</mosaic_0001>

<llo_original>
// kernel: replicator_shallow_mlp2.1
$region0: #{replicator_shallow_mlp2.1}
  #allocation0 [shape = 'u32[]', space=smem, size = 0x4, offset = 0x4, fixed_abs, tag = 'smem constant byte address 0x4 - core index']
  #allocation1 [shape = 'u32[144,128]{1,0:T(1,128)}', space=vmem, size = 0x12000, scoped, tag = 'internal scratch']
  #allocation2 [shape = 'f32[1,1]{1,0:T(1,128)S(1)}', space=vmem, size = 0x200, scoped, tag = 'scoped memory for replicator_shallow_mlp2.1']
  %s0 = inlined_call_operand.hbm [shape: f32[8,16], index: 0, kind: input, shape index: {}]
  %s1 = inlined_call_operand.vmem [shape: f32[16,32], index: 1, kind: input, shape index: {}]
  %s2 = inlined_call_operand.vmem [shape: f32[1,32], index: 2, kind: input, shape index: {}]
  %s3 = inlined_call_operand.vmem [shape: f32[32,32], index: 3, kind: input, shape index: {}]
  %s4 = inlined_call_operand.vmem [shape: f32[1,32], index: 4, kind: input, shape index: {}]
  %s5 = inlined_call_operand.vmem [shape: f32[32,16], index: 5, kind: input, shape index: {}]
  %s6 = inlined_call_operand.vmem [shape: f32[1,16], index: 6, kind: input, shape index: {}]
  %s7 = inlined_call_operand.<no memory space> [shape: f32[1,1], index: 7, kind: input, shape index: {}]
  %s8 = inlined_call_operand.hbm [shape: f32[8,16], index: 8, kind: output, shape index: {}]
  %s9 = sld [smem:[#allocation0]]
  $region46: #{replicator_shallow_mlp2.1} parent=0
    _
  %s11 = ssub.s32 1, %s9
  %s12 = scalar_select 0, %s11, %s9
  %v13 = vstv %s7
  %14 = vst [vmem:[#allocation2] sm:$0x1] %v13
  $region1: #{replicator_shallow_mlp2.1} parent=0
    #allocation3 [shape = 'u8[4096]{0}', space=vmem, size = 0x1000, scoped, tag = 'input window, operand 0, single buffered']
    #allocation4 [shape = 's32[1]{0}', space=sflag, size = 0x4, scoped, tag = 'scoped memory for replicator_shallow_mlp2.1']
    #allocation5 [shape = 's32[1]{0}', space=sflag, size = 0x4, scoped, tag = 'scoped memory for replicator_shallow_mlp2.1']
    #allocation6 [shape = 'u8[4096]{0}', space=vmem, size = 0x1000, scoped, tag = 'output window, operand 0, single buffered']
    %15 = vsyncpa [#allocation4], 0
    %16 = vsyncpa [#allocation5], 0
    // Predicated region
    $region2: #{replicator_shallow_mlp2.1} parent=1 // pred_check
      _
    $region3: #{replicator_shallow_mlp2.1} parent=1 // pred_check_branch
      %18 = sbr.rel (0) target = $region5
    $region4: #{replicator_shallow_mlp2.1} parent=1 // pred_region
      %s20 = ssub.s32 128, 128
      %21 = vsyncadd [#allocation4], %s20
      %s23 = sshll.u32 [#allocation3], 4
      %s24 = int_to_ptr.vmem [resolvable:$true] %s23
      %26 = dma.hbm_to_vmem [thread:$0]  %s0, 128, %s24, [#allocation4]
    $region5: #{replicator_shallow_mlp2.1} parent=1 // pred_fallthru
      _
    // Predicated region
    $region6: #{replicator_shallow_mlp2.1} parent=1 // pred_check
      _
    $region7: #{replicator_shallow_mlp2.1} parent=1 // pred_check_branch
      %28 = sbr.rel (0) target = $region9
    $region8: #{replicator_shallow_mlp2.1} parent=1 // pred_region
      _
    $region9: #{replicator_shallow_mlp2.1} parent=1 // pred_fallthru
      _
    // Predicated region
    $region10: #{replicator_shallow_mlp2.1} parent=1 // pred_check
      _
    $region11: #{replicator_shallow_mlp2.1} parent=1 // pred_check_branch
      %30 = sbr.rel (0) target = $region13
    $region12: #{replicator_shallow_mlp2.1} parent=1 // pred_region
      _
    $region13: #{replicator_shallow_mlp2.1} parent=1 // pred_fallthru
      _
    // Predicated region
    $region14: #{replicator_shallow_mlp2.1} parent=1 // pred_check
      _
    $region15: #{replicator_shallow_mlp2.1} parent=1 // pred_check_branch
      %32 = sbr.rel (0) target = $region17
    $region16: #{replicator_shallow_mlp2.1} parent=1 // pred_region
      _
    $region17: #{replicator_shallow_mlp2.1} parent=1 // pred_fallthru
      _
    // Predicated region
    $region18: #{replicator_shallow_mlp2.1} parent=1 // pred_check
      _
    $region19: #{replicator_shallow_mlp2.1} parent=1 // pred_check_branch
      %34 = sbr.rel (0) target = $region21
    $region20: #{replicator_shallow_mlp2.1} parent=1 // pred_region
      _
    $region21: #{replicator_shallow_mlp2.1} parent=1 // pred_fallthru
      _
    // Predicated region
    $region22: #{replicator_shallow_mlp2.1} parent=1 // pred_check
      _
    $region23: #{replicator_shallow_mlp2.1} parent=1 // pred_check_branch
      %36 = sbr.rel (0) target = $region25
    $region24: #{replicator_shallow_mlp2.1} parent=1 // pred_region
      _
    $region25: #{replicator_shallow_mlp2.1} parent=1 // pred_fallthru
      _
    // Predicated region
    $region26: #{replicator_shallow_mlp2.1} parent=1 // pred_check
      _
    $region27: #{replicator_shallow_mlp2.1} parent=1 // pred_check_branch
      %38 = sbr.rel (0) target = $region29
    $region28: #{replicator_shallow_mlp2.1} parent=1 // pred_region
      _
    $region29: #{replicator_shallow_mlp2.1} parent=1 // pred_fallthru
      _
    // Predicated region
    $region30: #{replicator_shallow_mlp2.1} parent=1 // pred_check
      _
    $region31: #{replicator_shallow_mlp2.1} parent=1 // pred_check_branch
      %40 = sbr.rel (0) target = $region33
    $region32: #{replicator_shallow_mlp2.1} parent=1 // pred_region
      _
    $region33: #{replicator_shallow_mlp2.1} parent=1 // pred_fallthru
      _
    // Predicated region
    $region34: #{replicator_shallow_mlp2.1} parent=1 // pred_check
      _
    $region35: #{replicator_shallow_mlp2.1} parent=1 // pred_check_branch
      %42 = sbr.rel (0) target = $region37
    $region36: #{replicator_shallow_mlp2.1} parent=1 // pred_region
      %43 = dma.done [#allocation4], 128
    $region37: #{replicator_shallow_mlp2.1} parent=1 // pred_fallthru
      _
    %v44 = vld [vmem:[#allocation3] sm:$0xff]
    %v45 = vld [vmem:[%s1] sm:$0xff]
    %v46 = vld [vmem:[%s1 + $0x8] sm:$0xff]
    %v47 = vld [vmem:[%s2] sm:$0x1]
    %v49 = vlaneseq
    %v50 = vshrl.u32 %v49, 7
    %v51 = vsub.s32 0, %v50
    %v52 = vrot.slane %v47, %v51
    %vm54 = vcmask 130048
    %v56 = vsel %vm54, %v44, 0
    %58 = vmatprep.subr.mxu0 0.0
    %59 = vmatpush1.msra.mxu0 0.0
    %60 = vmatprep.subr.mxu0 0.0
    %61 = vmatpush1.msra.mxu0 0.0
    %62 = vmatprep.subr.mxu0 0.0
    %63 = vmatpush1.msra.mxu0 0.0
    %64 = vmatprep.subr.mxu0 0.0
    %65 = vmatpush1.msra.mxu0 0.0
    %66 = vmatprep.subr.mxu0 0.0
    %67 = vmatpush1.msra.mxu0 0.0
    %68 = vmatprep.subr.mxu0 0.0
    %69 = vmatpush1.msra.mxu0 0.0
    %70 = vmatprep.subr.mxu0 0.0
    %71 = vmatpush1.msra.mxu0 0.0
    %72 = vmatprep.subr.mxu0 0.0
    %73 = vmatpush1.msra.mxu0 0.0
    %74 = vmatprep.subr.mxu0 0.0
    %75 = vmatpush1.msra.mxu0 0.0
    %76 = vmatprep.subr.mxu0 0.0
    %77 = vmatpush1.msra.mxu0 0.0
    %78 = vmatprep.subr.mxu0 0.0
    %79 = vmatpush1.msra.mxu0 0.0
    %80 = vmatprep.subr.mxu0 0.0
    %81 = vmatpush1.msra.mxu0 0.0
    %82 = vmatprep.subr.mxu0 0.0
    %83 = vmatpush1.msra.mxu0 0.0
    %84 = vmatprep.subr.mxu0 0.0
    %85 = vmatpush1.msra.mxu0 0.0
    %86 = vmatprep.subr.mxu0 0.0
    %87 = vmatpush1.msra.mxu0 %v46
    %88 = vmatprep.subr.mxu0 0.0
    %89 = vmatpush1.msra.mxu0 %v45
    %90 = vmatprep.subr.mxu0 0.0
    %91 = vmatpush2.msra.mxu0 0.0
    %92 = vmatprep.subr.mxu0 0.0
    %93 = vmatpush2.msra.mxu0 0.0
    %94 = vmatprep.subr.mxu0 0.0
    %95 = vmatpush2.msra.mxu0 0.0
    %96 = vmatprep.subr.mxu0 0.0
    %97 = vmatpush2.msra.mxu0 0.0
    %98 = vmatprep.subr.mxu0 0.0
    %99 = vmatpush2.msra.mxu0 0.0
    %100 = vmatprep.subr.mxu0 0.0
    %101 = vmatpush2.msra.mxu0 0.0
    %102 = vmatprep.subr.mxu0 0.0
    %103 = vmatpush2.msra.mxu0 0.0
    %104 = vmatprep.subr.mxu0 0.0
    %105 = vmatpush2.msra.mxu0 0.0
    %106 = vmatprep.subr.mxu0 0.0
    %107 = vmatpush2.msra.mxu0 0.0
    %108 = vmatprep.subr.mxu0 0.0
    %109 = vmatpush2.msra.mxu0 0.0
    %110 = vmatprep.subr.mxu0 0.0
    %111 = vmatpush2.msra.mxu0 0.0
    %112 = vmatprep.subr.mxu0 0.0
    %113 = vmatpush2.msra.mxu0 0.0
    %114 = vmatprep.subr.mxu0 0.0
    %115 = vmatpush2.msra.mxu0 0.0
    %116 = vmatprep.subr.mxu0 0.0
    %117 = vmatpush2.msra.mxu0 0.0
    %118 = vmatprep.subr.mxu0 0.0
    %119 = vmatpush2.msra.mxu0 0.0
    %120 = vmatprep.subr.mxu0 0.0
    %121 = vmatpush2.msra.mxu0 0.0
    %122 = vmatprep.mubr.f32.mxu0 0.0
    %123 = vmatmul.mubr.f32.gmra.mxu0 %v56
    %v124 = vpop.f32.mrf.mxu0
    %v125 = vadd.f32 %v52, %v124
    %v126 = vpop.f32.mrf.mxu0
    %127 = vdwg.mxu0
    %v128 = vtanh.pop %v125
    %v129 = vld [vmem:[%s3] sm:$0xff]
    %v130 = vld [vmem:[%s3 + $0x8] sm:$0xff]
    %v131 = vld [vmem:[%s3 + $0x10] sm:$0xff]
    %v132 = vld [vmem:[%s3 + $0x18] sm:$0xff]
    %v133 = vld [vmem:[%s4] sm:$0x1]
    %v135 = vlaneseq
    %v136 = vshrl.u32 %v135, 7
    %v137 = vsub.s32 0, %v136
    %v138 = vrot.slane %v133, %v137
    %vm140 = vcmask 261120
    %v142 = vsel %vm140, %v128, 0
    %144 = vmatprep.subr.mxu0 0.0
    %145 = vmatpush1.msra.mxu0 0.0
    %146 = vmatprep.subr.mxu0 0.0
    %147 = vmatpush1.msra.mxu0 0.0
    %148 = vmatprep.subr.mxu0 0.0
    %149 = vmatpush1.msra.mxu0 0.0
    %150 = vmatprep.subr.mxu0 0.0
    %151 = vmatpush1.msra.mxu0 0.0
    %152 = vmatprep.subr.mxu0 0.0
    %153 = vmatpush1.msra.mxu0 0.0
    %154 = vmatprep.subr.mxu0 0.0
    %155 = vmatpush1.msra.mxu0 0.0
    %156 = vmatprep.subr.mxu0 0.0
    %157 = vmatpush1.msra.mxu0 0.0
    %158 = vmatprep.subr.mxu0 0.0
    %159 = vmatpush1.msra.mxu0 0.0
    %160 = vmatprep.subr.mxu0 0.0
    %161 = vmatpush1.msra.mxu0 0.0
    %162 = vmatprep.subr.mxu0 0.0
    %163 = vmatpush1.msra.mxu0 0.0
    %164 = vmatprep.subr.mxu0 0.0
    %165 = vmatpush1.msra.mxu0 0.0
    %166 = vmatprep.subr.mxu0 0.0
    %167 = vmatpush1.msra.mxu0 0.0
    %168 = vmatprep.subr.mxu0 0.0
    %169 = vmatpush1.msra.mxu0 %v132
    %170 = vmatprep.subr.mxu0 0.0
    %171 = vmatpush1.msra.mxu0 %v131
    %172 = vmatprep.subr.mxu0 0.0
    %173 = vmatpush1.msra.mxu0 %v130
    %174 = vmatprep.subr.mxu0 0.0
    %175 = vmatpush1.msra.mxu0 %v129
    %176 = vmatprep.subr.mxu0 0.0
    %177 = vmatpush2.msra.mxu0 0.0
    %178 = vmatprep.subr.mxu0 0.0
    %179 = vmatpush2.msra.mxu0 0.0
    %180 = vmatprep.subr.mxu0 0.0
    %181 = vmatpush2.msra.mxu0 0.0
    %182 = vmatprep.subr.mxu0 0.0
    %183 = vmatpush2.msra.mxu0 0.0
    %184 = vmatprep.subr.mxu0 0.0
    %185 = vmatpush2.msra.mxu0 0.0
    %186 = vmatprep.subr.mxu0 0.0
    %187 = vmatpush2.msra.mxu0 0.0
    %188 = vmatprep.subr.mxu0 0.0
    %189 = vmatpush2.msra.mxu0 0.0
    %190 = vmatprep.subr.mxu0 0.0
    %191 = vmatpush2.msra.mxu0 0.0
    %192 = vmatprep.subr.mxu0 0.0
    %193 = vmatpush2.msra.mxu0 0.0
    %194 = vmatprep.subr.mxu0 0.0
    %195 = vmatpush2.msra.mxu0 0.0
    %196 = vmatprep.subr.mxu0 0.0
    %197 = vmatpush2.msra.mxu0 0.0
    %198 = vmatprep.subr.mxu0 0.0
    %199 = vmatpush2.msra.mxu0 0.0
    %200 = vmatprep.subr.mxu0 0.0
    %201 = vmatpush2.msra.mxu0 0.0
    %202 = vmatprep.subr.mxu0 0.0
    %203 = vmatpush2.msra.mxu0 0.0
    %204 = vmatprep.subr.mxu0 0.0
    %205 = vmatpush2.msra.mxu0 0.0
    %206 = vmatprep.subr.mxu0 0.0
    %207 = vmatpush2.msra.mxu0 0.0
    %208 = vmatprep.mubr.f32.mxu0 0.0
    %209 = vmatmul.mubr.f32.gmra.mxu0 %v142
    %v210 = vpop.f32.mrf.mxu0
    %v211 = vadd.f32 %v138, %v210
    %v212 = vpop.f32.mrf.mxu0
    %213 = vdwg.mxu0
    %v214 = vtanh.pop %v211
    %v215 = vld [vmem:[%s5] sm:$0xff]
    %v216 = vld [vmem:[%s5 + $0x8] sm:$0xff]
    %v217 = vld [vmem:[%s5 + $0x10] sm:$0xff]
    %v218 = vld [vmem:[%s5 + $0x18] sm:$0xff]
    %v219 = vld [vmem:[%s6] sm:$0x1]
    %v221 = vlaneseq
    %v222 = vshrl.u32 %v221, 7
    %v223 = vsub.s32 0, %v222
    %v224 = vrot.slane %v219, %v223
    %v227 = vsel %vm140, %v214, 0
    %229 = vmatprep.subr.mxu0 0.0
    %230 = vmatpush1.msra.mxu0 0.0
    %231 = vmatprep.subr.mxu0 0.0
    %232 = vmatpush1.msra.mxu0 0.0
    %233 = vmatprep.subr.mxu0 0.0
    %234 = vmatpush1.msra.mxu0 0.0
    %235 = vmatprep.subr.mxu0 0.0
    %236 = vmatpush1.msra.mxu0 0.0
    %237 = vmatprep.subr.mxu0 0.0
    %238 = vmatpush1.msra.mxu0 0.0
    %239 = vmatprep.subr.mxu0 0.0
    %240 = vmatpush1.msra.mxu0 0.0
    %241 = vmatprep.subr.mxu0 0.0
    %242 = vmatpush1.msra.mxu0 0.0
    %243 = vmatprep.subr.mxu0 0.0
    %244 = vmatpush1.msra.mxu0 0.0
    %245 = vmatprep.subr.mxu0 0.0
    %246 = vmatpush1.msra.mxu0 0.0
    %247 = vmatprep.subr.mxu0 0.0
    %248 = vmatpush1.msra.mxu0 0.0
    %249 = vmatprep.subr.mxu0 0.0
    %250 = vmatpush1.msra.mxu0 0.0
    %251 = vmatprep.subr.mxu0 0.0
    %252 = vmatpush1.msra.mxu0 0.0
    %253 = vmatprep.subr.mxu0 0.0
    %254 = vmatpush1.msra.mxu0 %v218
    %255 = vmatprep.subr.mxu0 0.0
    %256 = vmatpush1.msra.mxu0 %v217
    %257 = vmatprep.subr.mxu0 0.0
    %258 = vmatpush1.msra.mxu0 %v216
    %259 = vmatprep.subr.mxu0 0.0
    %260 = vmatpush1.msra.mxu0 %v215
    %261 = vmatprep.subr.mxu0 0.0
    %262 = vmatpush2.msra.mxu0 0.0
    %263 = vmatprep.subr.mxu0 0.0
    %264 = vmatpush2.msra.mxu0 0.0
    %265 = vmatprep.subr.mxu0 0.0
    %266 = vmatpush2.msra.mxu0 0.0
    %267 = vmatprep.subr.mxu0 0.0
    %268 = vmatpush2.msra.mxu0 0.0
    %269 = vmatprep.subr.mxu0 0.0
    %270 = vmatpush2.msra.mxu0 0.0
    %271 = vmatprep.subr.mxu0 0.0
    %272 = vmatpush2.msra.mxu0 0.0
    %273 = vmatprep.subr.mxu0 0.0
    %274 = vmatpush2.msra.mxu0 0.0
    %275 = vmatprep.subr.mxu0 0.0
    %276 = vmatpush2.msra.mxu0 0.0
    %277 = vmatprep.subr.mxu0 0.0
    %278 = vmatpush2.msra.mxu0 0.0
    %279 = vmatprep.subr.mxu0 0.0
    %280 = vmatpush2.msra.mxu0 0.0
    %281 = vmatprep.subr.mxu0 0.0
    %282 = vmatpush2.msra.mxu0 0.0
    %283 = vmatprep.subr.mxu0 0.0
    %284 = vmatpush2.msra.mxu0 0.0
    %285 = vmatprep.subr.mxu0 0.0
    %286 = vmatpush2.msra.mxu0 0.0
    %287 = vmatprep.subr.mxu0 0.0
    %288 = vmatpush2.msra.mxu0 0.0
    %289 = vmatprep.subr.mxu0 0.0
    %290 = vmatpush2.msra.mxu0 0.0
    %291 = vmatprep.subr.mxu0 0.0
    %292 = vmatpush2.msra.mxu0 0.0
    %293 = vmatprep.mubr.f32.mxu0 0.0
    %294 = vmatmul.mubr.f32.gmra.mxu0 %v227
    %v295 = vpop.f32.mrf.mxu0
    %v296 = vadd.f32 %v224, %v295
    %v297 = vpop.f32.mrf.mxu0
    %298 = vdwg.mxu0
    %v299 = vld [vmem:[#allocation2] sm:$0x1]
    %v301 = vlaneseq
    %v302 = vshrl.u32 %v301, 7
    %v303 = vsub.s32 0, %v302
    %v304 = vrot.slane %v299, %v303
    %305 = vset.pattern.permute.xlu0 0
    %306 = vperm.xlu0 %305, %v304
    %v307 = vpop.permute.xlu0 %306
    %v309 = vmul.f32 %v307, %v44
    %v310 = vadd.f32 %v296, %v309
    %v311 = vmul.f32 %v44, %v310
    %v312 = vsel %vm54, %v311, 0.0
    %313 = vadd.xlane.f32.xlu0 %v312
    %v314 = vpop.xlane.xlu0 %313
    %v315 = vsub.f32 %v310, %v314
    %v316 = vmul.f32 %v44, %v315
    %317 = vst.msk [vmem:[#allocation6] sm:$0xff] %vm54, %v316
    // Predicated region
    $region38: #{replicator_shallow_mlp2.1} parent=1 // pred_check
      _
    $region39: #{replicator_shallow_mlp2.1} parent=1 // pred_check_branch
      %319 = sbr.rel (0) target = $region41
    $region40: #{replicator_shallow_mlp2.1} parent=1 // pred_region
      %s321 = ssub.s32 128, 128
      %322 = vsyncadd [#allocation5], %s321
      %s324 = sshll.u32 [#allocation6], 4
      %s325 = int_to_ptr.vmem [resolvable:$true] %s324
      %327 = dma.vmem_to_hbm [thread:$0]  %s325, 128, %s8, [#allocation5]
    $region41: #{replicator_shallow_mlp2.1} parent=1 // pred_fallthru
      _
    // Predicated region
    $region42: #{replicator_shallow_mlp2.1} parent=1 // pred_check
      _
    $region43: #{replicator_shallow_mlp2.1} parent=1 // pred_check_branch
      %329 = sbr.rel (0) target = $region45
    $region44: #{replicator_shallow_mlp2.1} parent=1 // pred_region
      %330 = dma.done [#allocation5], 128
    $region45: #{replicator_shallow_mlp2.1} parent=1 // pred_fallthru
      _
    %331 = vsyncpa [#allocation4], 1
    %332 = vsyncpa [#allocation5], 1

</llo_original>
